<compile_context>
chip_gen: v7x
topology: tpu7x:2x2x1
jax: 0.10.0
libtpu: 0.0.40
codegen_flags: <defaults>
</compile_context>

<pallas_src>
import functools

import jax
import jax.numpy as jnp
from jax import lax
from jax.experimental import pallas as pl
from jax.experimental.pallas import tpu as pltpu

LANES = 128
SUBLANES = 8


def _rmse_partial_kernel(x_ref, y_ref, o_ref, *, tile_rows, chunk_rows,
                         steps_per_part, total_steps, valid_rows, mask_tail,
                         need_valid_guard):
    c = pl.program_id(0)   # partial-sum index ("parallel"; v7x TensorCore)
    i = pl.program_id(1)   # row-tile index within the part ("arbitrary")
    g = c * steps_per_part + i          # global step index
    num_chunks = tile_rows // chunk_rows

    @pl.when(i == 0)
    def _():
        o_ref[...] = jnp.zeros_like(o_ref)

    def chunk_partial(k, masked):
        r0 = k * chunk_rows
        if not isinstance(r0, int):
            r0 = pl.multiple_of(r0, SUBLANES)
        xs = x_ref[pl.ds(r0, chunk_rows), :].astype(jnp.float32)
        ys = y_ref[pl.ds(r0, chunk_rows), :].astype(jnp.float32)
        d = xs - ys
        sq = d * d
        if masked:
            # Rows past `valid_rows` are edge-block garbage (possibly NaN);
            # mask BEFORE reducing so they contribute exactly 0.
            row = (g * tile_rows + r0
                   + lax.broadcasted_iota(jnp.int32, sq.shape, 0))
            sq = jnp.where(row < valid_rows, sq, jnp.float32(0.0))
        # Fold chunk_rows -> 8 sublanes: cheap VPU adds hidden under the DMA.
        return sq.reshape(-1, SUBLANES, LANES).sum(axis=0)[None]

    def accumulate(masked):
        if num_chunks == 1:
            o_ref[...] += chunk_partial(0, masked)
        else:
            @pl.loop(0, num_chunks)
            def _(k):
                o_ref[...] += chunk_partial(k, masked)

    if mask_tail:
        # Only the globally-last step can hold garbage rows; all other valid
        # steps take the unmasked fast path.  Clamped duplicate steps of an
        # uneven 2-part split (g >= total_steps) match neither branch.
        @pl.when(g < total_steps - 1)
        def _():
            accumulate(False)

        @pl.when(g == total_steps - 1)
        def _():
            accumulate(True)
    elif need_valid_guard:
        @pl.when(g < total_steps)
        def _():
            accumulate(False)
    else:
        accumulate(False)


def rmse_loss(x, y, *, block_bytes=4 * 1024 * 1024, chunk_rows=2048):
    """sqrt(mean((x - y)**2)) over all elements, via a Pallas TPU kernel."""
    assert x.shape == y.shape, "x and y must have the same shape"
    n = x.size
    assert n > 0

    xf = x.reshape(-1)
    yf = y.reshape(-1)

    rows = pl.cdiv(n, LANES)
    lane_pad = rows * LANES - n
    if lane_pad:
        # TODO(synk): ragged n % 128 still pays one padded HBM copy of both
        # inputs; a flat 1-D-block kernel with a flat-index mask would avoid
        # it but needs layout-safe in-kernel (N*128,)->(N,128) reshapes.
        xf = jnp.pad(xf, (0, lane_pad))
        yf = jnp.pad(yf, (0, lane_pad))
    xf = xf.reshape(rows, LANES)
    yf = yf.reshape(rows, LANES)

    # Dtype-aware row-tile size from a byte budget (~4 MiB per input block per
    # pipeline buffer), clamped for small inputs, multiple of 8 sublanes.
    itemsize = max(jnp.dtype(x.dtype).itemsize, jnp.dtype(y.dtype).itemsize)
    budget_rows = max(SUBLANES, block_bytes // (LANES * itemsize))
    rows_r8 = ((rows + SUBLANES - 1) // SUBLANES) * SUBLANES
    tile_rows = max(SUBLANES,
                    (min(budget_rows, rows_r8) // SUBLANES) * SUBLANES)

    # In-kernel chunking bounds the f32 value footprint (~4 MiB at 2048 rows)
    # independent of the DMA block size.
    chunk = max(SUBLANES, (min(chunk_rows, tile_rows) // SUBLANES) * SUBLANES)
    tile_rows = (tile_rows // chunk) * chunk

    total_steps = pl.cdiv(rows, tile_rows)
    # Always split into two partial sums so v7x's two TensorCores each stream
    # half the rows; a sequential (and at most one wasted, skipped) extra step
    # on 1-TC v5e/v6e.
    # TODO(synk): if the "parallel" axis is found not to shard across v7x
    # cores, switch this axis to pltpu.CORE_PARALLEL / pl.core_map.
    num_parts = 2 if total_steps >= 2 else 1
    steps_per_part = pl.cdiv(total_steps, num_parts)
    need_valid_guard = steps_per_part * num_parts != total_steps
    mask_tail = (rows % tile_rows) != 0

    kernel = functools.partial(
        _rmse_partial_kernel,
        tile_rows=tile_rows,
        chunk_rows=chunk,
        steps_per_part=steps_per_part,
        total_steps=total_steps,
        valid_rows=rows,
        mask_tail=mask_tail,
        need_valid_guard=need_valid_guard,
    )

    # Clamp so the duplicate step of an uneven split DMAs an in-bounds block;
    # the kernel's validity guard skips its accumulation.
    def in_map(c, i):
        return (jnp.minimum(c * steps_per_part + i, total_steps - 1), 0)

    bytes_accessed = rows * LANES * (jnp.dtype(x.dtype).itemsize
                                     + jnp.dtype(y.dtype).itemsize)

    partials = pl.pallas_call(
        kernel,
        out_shape=jax.ShapeDtypeStruct((num_parts, SUBLANES, LANES),
                                       jnp.float32),
        grid_spec=pltpu.PrefetchScalarGridSpec(
            num_scalar_prefetch=0,
            grid=(num_parts, steps_per_part),
            in_specs=[
                pl.BlockSpec((tile_rows, LANES), in_map),
                pl.BlockSpec((tile_rows, LANES), in_map),
            ],
            out_specs=pl.BlockSpec((1, SUBLANES, LANES),
                                   lambda c, i: (c, 0, 0)),
        ),
        compiler_params=pltpu.CompilerParams(
            dimension_semantics=("parallel", "arbitrary"),
            # 2 inputs x 2 buffers x <=4 MiB blocks + chunked f32 values stay
            # well under this; 48 MiB < v7x's 64 MiB physical VMEM and lifts
            # v5e's 16 MiB scoped default.
            vmem_limit_bytes=48 * 1024 * 1024,
        ),
        cost_estimate=pl.CostEstimate(
            flops=3 * n, transcendentals=0, bytes_accessed=int(bytes_accessed)
        ),
    )(xf, yf)

    # Tiny final cross-lane reduce over (num_parts, 8, 128) + mean + sqrt.
    return jnp.sqrt(jnp.sum(partials) / jnp.float32(n))


if __name__ == "__main__":
    def _check(shape, dtype=jnp.float32, **kw):
        key = jax.random.PRNGKey(0)
        kx, ky = jax.random.split(key)
        x = jax.random.normal(kx, shape, dtype=dtype)
        y = jax.random.normal(ky, shape, dtype=dtype)
        got = jax.block_until_ready(rmse_loss(x, y, **kw))
        ref = jnp.sqrt(jnp.mean((x.astype(jnp.float32)
                                 - y.astype(jnp.float32)) ** 2))
        assert jnp.allclose(got, ref, rtol=1e-5, atol=1e-6), (shape, got, ref)

    # Small NCHW-shaped example (loss is shape-agnostic): single full tile.
    _check((2, 4, 16, 16))
    # Odd step count -> uneven 2-part split (clamped index_map + validity
    # guard) plus ragged row-tail mask and ragged n % 128 fallback.
    _check((2, 3, 33, 13), block_bytes=SUBLANES * LANES * 4)
    # Multi-chunk inner loop + ragged tail on the last block.
    _check((1, 2, 50, 27), block_bytes=2 * SUBLANES * LANES * 4,
           chunk_rows=SUBLANES)

    print("KERNEL_OK")
</pallas_src>

<mosaic_0001>
module attributes {stable_mosaic.version = 11 : i64} {
  func.func @_rmse_partial_kernel(%arg0: i32, %arg1: i32, %arg2: memref<16x128xf32, #tpu.memory_space<vmem>>, %arg3: memref<16x128xf32, #tpu.memory_space<vmem>>, %arg4: memref<1x8x128xf32, #tpu.memory_space<vmem>>) attributes {dimension_semantics = [#tpu.dimension_semantics<parallel>, #tpu.dimension_semantics<arbitrary>], iteration_bounds = array<i64: 1, 1>, scalar_prefetch = 0 : i64, scratch_operands = 0 : i64, tpu.core_type = #tpu.core_type<tc>, window_params = [{transform_indices = @transform_0, window_bounds = array<i64: 16, 128>}, {transform_indices = @transform_1, window_bounds = array<i64: 16, 128>}, {transform_indices = @transform_2, window_bounds = array<i64: 1, 8, 128>}]} {
    %c0_i32 = arith.constant 0 : i32
    %0 = arith.cmpi eq, %arg1, %c0_i32 : i32
    %1 = arith.extui %0 : i1 to i32
    %c0_i32_0 = arith.constant 0 : i32
    %2 = arith.cmpi ne, %1, %c0_i32_0 : i32
    scf.if %2 {
      %cst_10 = arith.constant 0.000000e+00 : f32
      %13 = vector.broadcast %cst_10 : f32 to vector<1x8x128xf32>
      %c0_11 = arith.constant 0 : index
      %c0_12 = arith.constant 0 : index
      %c0_13 = arith.constant 0 : index
      %14 = vector.load %arg4[%c0_11, %c0_12, %c0_13] : memref<1x8x128xf32, #tpu.memory_space<vmem>>, vector<1x8x128xf32>
      tpu.vector_store %arg4[%c0_11, %c0_12, %c0_13], %13 {strides = array<i32>} : memref<1x8x128xf32, #tpu.memory_space<vmem>>, vector<1x8x128xf32>,
    } else {
    }
    %c0 = arith.constant 0 : index
    %c0_1 = arith.constant 0 : index
    %c0_2 = arith.constant 0 : index
    %3 = vector.load %arg4[%c0, %c0_1, %c0_2] : memref<1x8x128xf32, #tpu.memory_space<vmem>>, vector<1x8x128xf32>
    %c0_3 = arith.constant 0 : index
    %c0_4 = arith.constant 0 : index
    %4 = vector.load %arg2[%c0_3, %c0_4] : memref<16x128xf32, #tpu.memory_space<vmem>>, vector<16x128xf32>
    %c0_5 = arith.constant 0 : index
    %c0_6 = arith.constant 0 : index
    %5 = vector.load %arg3[%c0_5, %c0_6] : memref<16x128xf32, #tpu.memory_space<vmem>>, vector<16x128xf32>
    %6 = arith.subf %4, %5 : vector<16x128xf32>
    %7 = arith.mulf %6, %6 : vector<16x128xf32>
    %8 = vector.shape_cast %7 : vector<16x128xf32> to vector<2x8x128xf32>
    %cst = arith.constant dense<0.000000e+00> : vector<8x128xf32>
    %9 = vector.multi_reduction <add>, %8, %cst [0] : vector<2x8x128xf32> to vector<8x128xf32>
    %10 = vector.shape_cast %9 : vector<8x128xf32> to vector<1x8x128xf32>
    %11 = arith.addf %3, %10 : vector<1x8x128xf32>
    %c0_7 = arith.constant 0 : index
    %c0_8 = arith.constant 0 : index
    %c0_9 = arith.constant 0 : index
    %12 = vector.load %arg4[%c0_7, %c0_8, %c0_9] : memref<1x8x128xf32, #tpu.memory_space<vmem>>, vector<1x8x128xf32>
    tpu.vector_store %arg4[%c0_7, %c0_8, %c0_9], %11 {strides = array<i32>} : memref<1x8x128xf32, #tpu.memory_space<vmem>>, vector<1x8x128xf32>,
    return
  }
  func.func @transform_0(%arg0: i32, %arg1: i32) -> (i32, i32) {
    %c1_i32 = arith.constant 1 : i32
    %0 = arith.muli %arg0, %c1_i32 : i32
    %1 = arith.addi %0, %arg1 : i32
    %c0_i32 = arith.constant 0 : i32
    %2 = arith.minsi %1, %c0_i32 : i32
    %c0_i32_0 = arith.constant 0 : i32
    %c0_i32_1 = arith.constant 0 : i32
    return %2, %c0_i32_0 : i32, i32
  }
  func.func @transform_1(%arg0: i32, %arg1: i32) -> (i32, i32) {
    %c1_i32 = arith.constant 1 : i32
    %0 = arith.muli %arg0, %c1_i32 : i32
    %1 = arith.addi %0, %arg1 : i32
    %c0_i32 = arith.constant 0 : i32
    %2 = arith.minsi %1, %c0_i32 : i32
    %c0_i32_0 = arith.constant 0 : i32
    %c0_i32_1 = arith.constant 0 : i32
    return %2, %c0_i32_0 : i32, i32
  }
  func.func @transform_2(%arg0: i32, %arg1: i32) -> (i32, i32, i32) {
    %c0_i32 = arith.constant 0 : i32
    %c0_i32_0 = arith.constant 0 : i32
    %c0_i32_1 = arith.constant 0 : i32
    return %arg0, %c0_i32, %c0_i32_0 : i32, i32, i32
  }
}

</mosaic_0001>

<llo_original>
// kernel: tpu_custom_call.1
$region0: #{tpu_custom_call.1}
  #allocation0 [shape = 'u32[]', space=smem, size = 0x4, offset = 0x4, fixed_abs, tag = 'smem constant byte address 0x4 - core index']
  #allocation1 [shape = 'u32[144,128]{1,0:T(1,128)}', space=vmem, size = 0x12000, scoped, tag = 'internal scratch']
  %s0 = inlined_call_operand.hbm [shape: f32[16,128], index: 0, kind: input, shape index: {}]
  %s1 = inlined_call_operand.hbm [shape: f32[16,128], index: 1, kind: input, shape index: {}]
  %s2 = inlined_call_operand.hbm [shape: f32[1,8,128], index: 2, kind: output, shape index: {}]
  %s3 = sld [smem:[#allocation0]]
  $region30: #{tpu_custom_call.1} parent=0
    _
  %s5 = ssub.s32 1, %s3
  %s6 = scalar_select 0, %s5, %s3
  $region1: #{tpu_custom_call.1} parent=0
    #allocation2 [shape = 'u8[8192]{0}', space=vmem, size = 0x2000, scoped, tag = 'input window, operand 0, single buffered']
    #allocation3 [shape = 's32[1]{0}', space=sflag, size = 0x4, scoped, tag = 'scoped memory for tpu_custom_call.1']
    #allocation4 [shape = 's32[1]{0}', space=sflag, size = 0x4, scoped, tag = 'scoped memory for tpu_custom_call.1']
    #allocation5 [shape = 'u8[8192]{0}', space=vmem, size = 0x2000, scoped, tag = 'input window, operand 1, single buffered']
    #allocation6 [shape = 's32[1]{0}', space=sflag, size = 0x4, scoped, tag = 'scoped memory for tpu_custom_call.1']
    #allocation7 [shape = 'u8[4096]{0}', space=vmem, size = 0x1000, scoped, tag = 'output window, operand 0, single buffered']
    %7 = vsyncpa [#allocation3], 0
    %8 = vsyncpa [#allocation6], 0
    %9 = vsyncpa [#allocation4], 0
    // Predicated region
    $region2: #{tpu_custom_call.1} parent=1 // pred_check
      _
    $region3: #{tpu_custom_call.1} parent=1 // pred_check_branch
      %11 = sbr.rel (0) target = $region5
    $region4: #{tpu_custom_call.1} parent=1 // pred_region
      %s12 = sadd.s32 0, 0
      %p13 = scmp.lt.s32.totalorder %s12, 0
      %s14 = scalar_select %p13, %s12, 0
      %s15 = smul.u32 2, %s14
      %s17 = ssub.s32 256, 256
      %18 = vsyncadd [#allocation3], %s17
      %s19 = smul.addr %s15, 128
      %s20 = scalar_lea.hbm %s0, %s19
      %s21 = sshll.u32 [#allocation2], 4
      %s22 = int_to_ptr.vmem [resolvable:$true] %s21
      %27 = dma.hbm_to_vmem [thread:$0]  %s20, 256, %s22, [#allocation3], 128, 128, 8
    $region5: #{tpu_custom_call.1} parent=1 // pred_fallthru
      _
    // Predicated region
    $region6: #{tpu_custom_call.1} parent=1 // pred_check
      _
    $region7: #{tpu_custom_call.1} parent=1 // pred_check_branch
      %29 = sbr.rel (0) target = $region9
    $region8: #{tpu_custom_call.1} parent=1 // pred_region
      %s30 = sadd.s32 0, 0
      %p31 = scmp.lt.s32.totalorder %s30, 0
      %s32 = scalar_select %p31, %s30, 0
      %s33 = smul.u32 2, %s32
      %s35 = ssub.s32 256, 256
      %36 = vsyncadd [#allocation6], %s35
      %s37 = smul.addr %s33, 128
      %s38 = scalar_lea.hbm %s1, %s37
      %s39 = sshll.u32 [#allocation5], 4
      %s40 = int_to_ptr.vmem [resolvable:$true] %s39
      %45 = dma.hbm_to_vmem [thread:$0]  %s38, 256, %s40, [#allocation6], 128, 128, 8
    $region9: #{tpu_custom_call.1} parent=1 // pred_fallthru
      _
    // Predicated region
    $region10: #{tpu_custom_call.1} parent=1 // pred_check
      _
    $region11: #{tpu_custom_call.1} parent=1 // pred_check_branch
      %47 = sbr.rel (0) target = $region13
    $region12: #{tpu_custom_call.1} parent=1 // pred_region
      %48 = dma.done [#allocation3], 256
    $region13: #{tpu_custom_call.1} parent=1 // pred_fallthru
      _
    // Predicated region
    $region14: #{tpu_custom_call.1} parent=1 // pred_check
      _
    $region15: #{tpu_custom_call.1} parent=1 // pred_check_branch
      %50 = sbr.rel (0) target = $region17
    $region16: #{tpu_custom_call.1} parent=1 // pred_region
      %51 = dma.done [#allocation6], 256
    $region17: #{tpu_custom_call.1} parent=1 // pred_fallthru
      _
    %s52 = sadd.s32 0, 0
    %p53 = scmp.lt.s32.totalorder %s52, 0
    %s54 = scalar_select %p53, %s52, 0
    %s55 = smul.u32 2, %s54
    %s56 = sadd.s32 0, 0
    %p57 = scmp.lt.s32.totalorder %s56, 0
    %s58 = scalar_select %p57, %s56, 0
    %s59 = smul.u32 2, %s58
    %p60 = scmp.eq.s32.totalorder 0, 0
    // Predicated region
    $region18: #{tpu_custom_call.1} parent=1 // pred_check
      %p61 = pneg %p60
    $region19: #{tpu_custom_call.1} parent=1 // pred_check_branch
      %63 = sbr.rel (%p61) target = $region21
    $region20: #{tpu_custom_call.1} parent=1 // pred_region
      %64 = vst [vmem:[#allocation7] sm:$0xff] 0.0
    $region21: #{tpu_custom_call.1} parent=1 // pred_fallthru
      _
    %v65 = vld [vmem:[#allocation7] sm:$0xff]
    %v66 = vld [vmem:[#allocation2] sm:$0xff]
    %v67 = vld [vmem:[#allocation2 + $0x8] sm:$0xff]
    %v68 = vld [vmem:[#allocation5] sm:$0xff]
    %v69 = vld [vmem:[#allocation5 + $0x8] sm:$0xff]
    %v70 = vsub.f32 %v66, %v68
    %v71 = vsub.f32 %v67, %v69
    %v72 = vmul.f32 %v70, %v70
    %v73 = vmul.f32 %v71, %v71
    %v74 = vadd.f32 %v72, %v73
    %v75 = vadd.f32 %v65, %v74
    %76 = vst [vmem:[#allocation7] sm:$0xff] %v75
    // Predicated region
    $region22: #{tpu_custom_call.1} parent=1 // pred_check
      _
    $region23: #{tpu_custom_call.1} parent=1 // pred_check_branch
      %78 = sbr.rel (0) target = $region25
    $region24: #{tpu_custom_call.1} parent=1 // pred_region
      %s80 = ssub.s32 128, 128
      %81 = vsyncadd [#allocation4], %s80
      %s83 = sshll.u32 [#allocation7], 4
      %s84 = int_to_ptr.vmem [resolvable:$true] %s83
      %86 = dma.vmem_to_hbm [thread:$0]  %s84, 128, %s2, [#allocation4]
    $region25: #{tpu_custom_call.1} parent=1 // pred_fallthru
      _
    // Predicated region
    $region26: #{tpu_custom_call.1} parent=1 // pred_check
      _
    $region27: #{tpu_custom_call.1} parent=1 // pred_check_branch
      %88 = sbr.rel (0) target = $region29
    $region28: #{tpu_custom_call.1} parent=1 // pred_region
      %89 = dma.done [#allocation4], 128
    $region29: #{tpu_custom_call.1} parent=1 // pred_fallthru
      _
    %90 = vsyncpa [#allocation3], 1
    %91 = vsyncpa [#allocation6], 1
    %92 = vsyncpa [#allocation4], 1

</llo_original>
